<compile_context>
chip_gen: v7x
topology: tpu7x:2x2x1
jax: 0.10.0
libtpu: 0.0.40
codegen_flags: <defaults>
</compile_context>

<pallas_src>
import functools

import jax
import jax.numpy as jnp
from jax.experimental import pallas as pl
from jax.experimental.pallas import tpu as pltpu


def _round_up(x, m):
    return (x + m - 1) // m * m


def _default_num_tensorcores():
    """Best-effort per-generation choice: >=2 grid steps only on megacore parts."""
    try:
        return max(1, int(getattr(jax.devices()[0], "num_cores", 1) or 1))
    except Exception:  # pragma: no cover - conservative fallback
        return 1


# ----------------------------------------------------------------------------
# Kernel
# ----------------------------------------------------------------------------
def encoder_kernel(x_ref, w1_ref, b1_ref, wh_ref, bh_ref, out_ref):
    # x_ref:  (bm, in_dim)          one batch tile, ORIGINAL dtype (f32)
    # w1_ref: (in_dim, hidden_p)    compute dtype;  b1_ref: (1, hidden_p) f32
    # wh_ref: (hidden_p, out_p)     compute dtype;  bh_ref: (1, out_p)   f32
    # out_ref:(bm, out_p)           out dtype (f32 default, optionally bf16)
    #
    # In-kernel cast to the compute dtype (no-op on the f32 path); the VPU
    # cast is hidden under the x DMA / MXU work.
    x = x_ref[...].astype(w1_ref.dtype)
    # Layer 1: MXU matmul with f32 accumulation; bias + ReLU on the VPU in f32.
    h = jnp.dot(x, w1_ref[...], preferred_element_type=jnp.float32)
    h = jnp.maximum(h + b1_ref[...], 0.0)
    # Layer 2: fused mu|var head over the lane-dense padded N.
    h = h.astype(wh_ref.dtype)
    out = jnp.dot(h, wh_ref[...], preferred_element_type=jnp.float32) + bh_ref[...]
    out_ref[...] = out.astype(out_ref.dtype)


# ----------------------------------------------------------------------------
# One-time parameter preparation (hoisted out of the forward path; cache it)
# ----------------------------------------------------------------------------
def prepare_encoder_params(params, compute_dtype=jnp.float32):
    """Pad/fuse/cast the raw (w1, b1, wmu, bmu, wvar, bvar) params ONCE.

    Returns a dict to be passed to `encoder_forward`.  Do this at init time
    and reuse it for every call — rebuilding it per call costs more than the
    kernel itself at these shapes.
    """
    w1, b1, wmu, bmu, wvar, bvar = params
    in_dim, hidden = w1.shape
    latent = wmu.shape[1]

    hidden_p = _round_up(hidden, 128)        # lane-dense intermediate
    out_p = _round_up(2 * latent, 128)       # lane-dense fused output

    cd = compute_dtype
    w1_p = jnp.zeros((in_dim, hidden_p), cd).at[:, :hidden].set(w1.astype(cd))
    b1_p = jnp.zeros((1, hidden_p), jnp.float32).at[:, :hidden].set(
        b1.astype(jnp.float32))

    w_head = jnp.concatenate([wmu, wvar], axis=1)        # [hidden, 2*latent]
    b_head = jnp.concatenate([bmu, bvar], axis=1)        # [1, 2*latent]
    wh_p = jnp.zeros((hidden_p, out_p), cd).at[:hidden, :2 * latent].set(
        w_head.astype(cd))
    bh_p = jnp.zeros((1, out_p), jnp.float32).at[:, :2 * latent].set(
        b_head.astype(jnp.float32))

    prepared = {
        "w1": w1_p, "b1": b1_p, "wh": wh_p, "bh": bh_p,
        "in_dim": in_dim, "hidden_p": hidden_p, "out_p": out_p,
        "latent": latent, "compute_dtype": cd,
    }
    # Materialize now so the prep cost is paid exactly once, not lazily on the
    # first forward call.
    jax.block_until_ready((w1_p, b1_p, wh_p, bh_p))
    return prepared


# ----------------------------------------------------------------------------
# Forward
# ----------------------------------------------------------------------------
def encoder_forward(x, prepared, *, bm=None, num_tensorcores=None,
                    out_dtype=jnp.float32):
    """x: [B, input_dim + n_classes] -> (z_mu, z_var) each [B, latent].

    `prepared` is the cached output of `prepare_encoder_params`.
    `bm` overrides the batch tile; by default it is chosen so the grid has
    `num_tensorcores` steps (>=2 on megacore chips so the "parallel" axis
    engages both TCs; a single large tile on single-TC chips).
    `out_dtype` controls the kernel's output store width (f32 default since
    logvar is precision-sensitive; bf16 halves the dominant write stream).
    """
    B, in_dim = x.shape
    assert in_dim == prepared["in_dim"]
    latent = prepared["latent"]
    out_p = prepared["out_p"]
    hidden_p = prepared["hidden_p"]

    # ---- batch tiling -------------------------------------------------------
    # Sublane granularity of the block shapes (x stays in its own dtype; the
    # output may be bf16).
    sub = 16 if (out_dtype == jnp.bfloat16 or x.dtype == jnp.bfloat16) else 8
    if bm is None:
        steps = num_tensorcores if num_tensorcores else _default_num_tensorcores()
        bm = _round_up(pl.cdiv(B, max(1, steps)), sub)
        bm = min(bm, 2048)                   # VMEM-safe cap on every generation
    bm = _round_up(max(sub, min(bm, _round_up(B, sub))), sub)
    B_pad = _round_up(B, bm)

    x_in = x
    if B_pad != B:                           # avoided whenever B divides cleanly
        x_in = jnp.pad(x, ((0, B_pad - B), (0, 0)))

    grid = (B_pad // bm,)
    # Weight/bias blocks are grid-invariant (block index always (0,0)), so
    # Pallas fetches them once and keeps them VMEM-resident across steps.
    full2d = lambda r, c: pl.BlockSpec((r, c), lambda i: (0, 0))

    out = pl.pallas_call(
        encoder_kernel,
        out_shape=jax.ShapeDtypeStruct((B_pad, out_p), out_dtype),
        grid_spec=pltpu.PrefetchScalarGridSpec(
            num_scalar_prefetch=0,
            grid=grid,
            in_specs=[
                pl.BlockSpec((bm, in_dim), lambda i: (i, 0)),   # x batch tile
                full2d(in_dim, hidden_p),                       # W1 (padded)
                full2d(1, hidden_p),                            # b1 (padded)
                full2d(hidden_p, out_p),                        # W_head (fused)
                full2d(1, out_p),                               # b_head (fused)
            ],
            out_specs=pl.BlockSpec((bm, out_p), lambda i: (i, 0)),
        ),
        compiler_params=pltpu.CompilerParams(
            dimension_semantics=("parallel",),   # megacore-shardable batch axis
            vmem_limit_bytes=32 * 1024 * 1024,   # explicit headroom (v7x-safe)
        ),
    )(x_in, prepared["w1"], prepared["b1"], prepared["wh"], prepared["bh"])

    # Split the fused head and drop padding outside the kernel (cheap slices).
    return out[:B, :latent], out[:B, latent:2 * latent]


# ----------------------------------------------------------------------------
# Parameters / reference
# ----------------------------------------------------------------------------
def init_params(key, input_dim, hidden_dim, latent_dim, n_classes):
    """Deterministic synthetic parameters (PyTorch Linear shapes, pre-transposed)."""
    in_features = input_dim + n_classes
    ks = jax.random.split(key, 6)

    def lin(kw, kb, fan_in, fan_out):
        bound = 1.0 / jnp.sqrt(fan_in)
        w = jax.random.uniform(kw, (fan_in, fan_out), jnp.float32, -bound, bound)
        b = jax.random.uniform(kb, (1, fan_out), jnp.float32, -bound, bound)
        return w, b

    w1, b1 = lin(ks[0], ks[1], in_features, hidden_dim)
    wmu, bmu = lin(ks[2], ks[3], hidden_dim, latent_dim)
    wvar, bvar = lin(ks[4], ks[5], hidden_dim, latent_dim)
    return (w1, b1, wmu, bmu, wvar, bvar)


def encoder_reference(x, params):
    w1, b1, wmu, bmu, wvar, bvar = params
    h = jnp.maximum(x @ w1 + b1, 0.0)
    return h @ wmu + bmu, h @ wvar + bvar


if __name__ == "__main__":
    # Shapes consistent with the module: input_dim=48, n_classes=16 (in=64),
    # hidden_dim=32, latent_dim=16, batch=256.
    input_dim, n_classes, hidden_dim, latent_dim, B = 48, 16, 32, 16, 256

    key = jax.random.PRNGKey(0)
    kx, kp = jax.random.split(key)
    x = jax.random.normal(kx, (B, input_dim + n_classes), jnp.float32)
    params = init_params(kp, input_dim, hidden_dim, latent_dim, n_classes)

    ref_mu, ref_var = encoder_reference(x, params)

    # ---- f32 path: prep once, tight correctness check ----------------------
    prep_f32 = prepare_encoder_params(params, compute_dtype=jnp.float32)
    z_mu, z_var = encoder_forward(x, prep_f32)       # bm auto (per-generation)
    jax.block_until_ready((z_mu, z_var))
    assert jnp.allclose(z_mu, ref_mu, atol=1e-5, rtol=1e-5)
    assert jnp.allclose(z_var, ref_var, atol=1e-5, rtol=1e-5)

    # Also exercise an explicit multi-step grid (the v7x megacore shape).
    z_mu2, z_var2 = encoder_forward(x, prep_f32, bm=128)
    jax.block_until_ready((z_mu2, z_var2))
    assert jnp.allclose(z_mu2, ref_mu, atol=1e-5, rtol=1e-5)
    assert jnp.allclose(z_var2, ref_var, atol=1e-5, rtol=1e-5)

    # ---- bf16 MXU path (the fast path): loose tolerance ---------------------
    # x stays f32 in HBM; the kernel casts it to bf16 internally.  Accumulation,
    # bias and ReLU remain f32; output is written in f32 by default.
    prep_bf16 = prepare_encoder_params(params, compute_dtype=jnp.bfloat16)
    z_mu16, z_var16 = encoder_forward(x, prep_bf16)
    jax.block_until_ready((z_mu16, z_var16))
    assert jnp.allclose(z_mu16, ref_mu, atol=3e-2, rtol=3e-2)
    assert jnp.allclose(z_var16, ref_var, atol=3e-2, rtol=3e-2)

    print("KERNEL_OK")
</pallas_src>

<mosaic_0001>
module attributes {stable_mosaic.version = 11 : i64} {
  func.func @encoder_kernel(%arg0: i32, %arg1: memref<256x64xf32, #tpu.memory_space<vmem>>, %arg2: memref<64x128xf32, #tpu.memory_space<vmem>>, %arg3: memref<1x128xf32, #tpu.memory_space<vmem>>, %arg4: memref<128x128xf32, #tpu.memory_space<vmem>>, %arg5: memref<1x128xf32, #tpu.memory_space<vmem>>, %arg6: memref<256x128xf32, #tpu.memory_space<vmem>>) attributes {dimension_semantics = [#tpu.dimension_semantics<parallel>], iteration_bounds = array<i64: 1>, scalar_prefetch = 0 : i64, scratch_operands = 0 : i64, tpu.core_type = #tpu.core_type<tc>, window_params = [{transform_indices = @transform_0, window_bounds = array<i64: 256, 64>}, {pipeline_mode = #tpu.pipeline_mode<synchronous>, transform_indices = @transform_1, window_bounds = array<i64: 64, 128>}, {pipeline_mode = #tpu.pipeline_mode<synchronous>, transform_indices = @transform_2, window_bounds = array<i64: 1, 128>}, {pipeline_mode = #tpu.pipeline_mode<synchronous>, transform_indices = @transform_3, window_bounds = array<i64: 128, 128>}, {pipeline_mode = #tpu.pipeline_mode<synchronous>, transform_indices = @transform_4, window_bounds = array<i64: 1, 128>}, {transform_indices = @transform_5, window_bounds = array<i64: 256, 128>}]} {
    %c0 = arith.constant 0 : index
    %c0_0 = arith.constant 0 : index
    %0 = vector.load %arg1[%c0, %c0_0] : memref<256x64xf32, #tpu.memory_space<vmem>>, vector<256x64xf32>
    %c0_1 = arith.constant 0 : index
    %c0_2 = arith.constant 0 : index
    %1 = vector.load %arg2[%c0_1, %c0_2] : memref<64x128xf32, #tpu.memory_space<vmem>>, vector<64x128xf32>
    %cst = arith.constant dense<0.000000e+00> : vector<256x128xf32>
    %2 = tpu.matmul %0, %1, %cst {dimension_numbers = #tpu.dot_dimension_numbers<[1], [0], [0], [1], [0, 0, 1, 1], [], []>} : vector<256x64xf32>, vector<64x128xf32>, vector<256x128xf32> -> vector<256x128xf32>
    %c0_3 = arith.constant 0 : index
    %c0_4 = arith.constant 0 : index
    %3 = vector.load %arg3[%c0_3, %c0_4] : memref<1x128xf32, #tpu.memory_space<vmem>>, vector<1x128xf32>
    %4 = vector.broadcast %3 : vector<1x128xf32> to vector<256x128xf32>
    %5 = arith.addf %2, %4 : vector<256x128xf32>
    %cst_5 = arith.constant 0.000000e+00 : f32
    %6 = vector.broadcast %cst_5 : f32 to vector<256x128xf32>
    %7 = arith.maximumf %5, %6 : vector<256x128xf32>
    %c0_6 = arith.constant 0 : index
    %c0_7 = arith.constant 0 : index
    %8 = vector.load %arg4[%c0_6, %c0_7] : memref<128x128xf32, #tpu.memory_space<vmem>>, vector<128x128xf32>
    %cst_8 = arith.constant dense<0.000000e+00> : vector<256x128xf32>
    %9 = tpu.matmul %7, %8, %cst_8 {dimension_numbers = #tpu.dot_dimension_numbers<[1], [0], [0], [1], [0, 0, 1, 1], [], []>} : vector<256x128xf32>, vector<128x128xf32>, vector<256x128xf32> -> vector<256x128xf32>
    %c0_9 = arith.constant 0 : index
    %c0_10 = arith.constant 0 : index
    %10 = vector.load %arg5[%c0_9, %c0_10] : memref<1x128xf32, #tpu.memory_space<vmem>>, vector<1x128xf32>
    %11 = vector.broadcast %10 : vector<1x128xf32> to vector<256x128xf32>
    %12 = arith.addf %9, %11 : vector<256x128xf32>
    %c0_11 = arith.constant 0 : index
    %c0_12 = arith.constant 0 : index
    %13 = vector.load %arg6[%c0_11, %c0_12] : memref<256x128xf32, #tpu.memory_space<vmem>>, vector<256x128xf32>
    tpu.vector_store %arg6[%c0_11, %c0_12], %12 {strides = array<i32>} : memref<256x128xf32, #tpu.memory_space<vmem>>, vector<256x128xf32>,
    return
  }
  func.func @transform_0(%arg0: i32) -> (i32, i32) {
    %c0_i32 = arith.constant 0 : i32
    %c0_i32_0 = arith.constant 0 : i32
    return %arg0, %c0_i32 : i32, i32
  }
  func.func @transform_1(%arg0: i32) -> (i32, i32) {
    %c0_i32 = arith.constant 0 : i32
    %c0_i32_0 = arith.constant 0 : i32
    %c0_i32_1 = arith.constant 0 : i32
    return %c0_i32, %c0_i32_0 : i32, i32
  }
  func.func @transform_2(%arg0: i32) -> (i32, i32) {
    %c0_i32 = arith.constant 0 : i32
    %c0_i32_0 = arith.constant 0 : i32
    %c0_i32_1 = arith.constant 0 : i32
    return %c0_i32, %c0_i32_0 : i32, i32
  }
  func.func @transform_3(%arg0: i32) -> (i32, i32) {
    %c0_i32 = arith.constant 0 : i32
    %c0_i32_0 = arith.constant 0 : i32
    %c0_i32_1 = arith.constant 0 : i32
    return %c0_i32, %c0_i32_0 : i32, i32
  }
  func.func @transform_4(%arg0: i32) -> (i32, i32) {
    %c0_i32 = arith.constant 0 : i32
    %c0_i32_0 = arith.constant 0 : i32
    %c0_i32_1 = arith.constant 0 : i32
    return %c0_i32, %c0_i32_0 : i32, i32
  }
  func.func @transform_5(%arg0: i32) -> (i32, i32) {
    %c0_i32 = arith.constant 0 : i32
    %c0_i32_0 = arith.constant 0 : i32
    return %arg0, %c0_i32 : i32, i32
  }
}

</mosaic_0001>

<llo_original>
// kernel: tpu_custom_call.1
$region0: #{tpu_custom_call.1}
  #allocation0 [shape = 'u32[]', space=smem, size = 0x4, offset = 0x4, fixed_abs, tag = 'smem constant byte address 0x4 - core index']
  #allocation1 [shape = 'u32[144,128]{1,0:T(1,128)}', space=vmem, size = 0x12000, scoped, tag = 'internal scratch']
  %s0 = inlined_call_operand.vmem [shape: f32[256,64], index: 0, kind: input, shape index: {}]
  %s1 = inlined_call_operand.vmem [shape: f32[64,128], index: 1, kind: input, shape index: {}]
  %s2 = inlined_call_operand.vmem [shape: f32[1,128], index: 2, kind: input, shape index: {}]
  %s3 = inlined_call_operand.vmem [shape: f32[128,128], index: 3, kind: input, shape index: {}]
  %s4 = inlined_call_operand.vmem [shape: f32[1,128], index: 4, kind: input, shape index: {}]
  %s5 = inlined_call_operand.hbm [shape: f32[256,128], index: 5, kind: output, shape index: {}]
  %s6 = sld [smem:[#allocation0]]
  $region30: #{tpu_custom_call.1} parent=0
    _
  %s8 = ssub.s32 1, %s6
  %s9 = scalar_select 0, %s8, %s6
  $region1: #{tpu_custom_call.1} parent=0
    #allocation2 [shape = 'u8[131072]{0}', space=vmem, size = 0x20000, scoped, tag = 'output window, operand 0, single buffered']
    #allocation3 [shape = 's32[1]{0}', space=sflag, size = 0x4, scoped, tag = 'scoped memory for tpu_custom_call.1']
    %10 = vsyncpa [#allocation3], 0
    // Predicated region
    $region2: #{tpu_custom_call.1} parent=1 // pred_check
      _
    $region3: #{tpu_custom_call.1} parent=1 // pred_check_branch
      %12 = sbr.rel (0) target = $region5
    $region4: #{tpu_custom_call.1} parent=1 // pred_region
      _
    $region5: #{tpu_custom_call.1} parent=1 // pred_fallthru
      _
    // Predicated region
    $region6: #{tpu_custom_call.1} parent=1 // pred_check
      _
    $region7: #{tpu_custom_call.1} parent=1 // pred_check_branch
      %14 = sbr.rel (0) target = $region9
    $region8: #{tpu_custom_call.1} parent=1 // pred_region
      _
    $region9: #{tpu_custom_call.1} parent=1 // pred_fallthru
      _
    // Predicated region
    $region10: #{tpu_custom_call.1} parent=1 // pred_check
      _
    $region11: #{tpu_custom_call.1} parent=1 // pred_check_branch
      %16 = sbr.rel (0) target = $region13
    $region12: #{tpu_custom_call.1} parent=1 // pred_region
      _
    $region13: #{tpu_custom_call.1} parent=1 // pred_fallthru
      _
    // Predicated region
    $region14: #{tpu_custom_call.1} parent=1 // pred_check
      _
    $region15: #{tpu_custom_call.1} parent=1 // pred_check_branch
      %18 = sbr.rel (0) target = $region17
    $region16: #{tpu_custom_call.1} parent=1 // pred_region
      _
    $region17: #{tpu_custom_call.1} parent=1 // pred_fallthru
      _
    // Predicated region
    $region18: #{tpu_custom_call.1} parent=1 // pred_check
      _
    $region19: #{tpu_custom_call.1} parent=1 // pred_check_branch
      %20 = sbr.rel (0) target = $region21
    $region20: #{tpu_custom_call.1} parent=1 // pred_region
      _
    $region21: #{tpu_custom_call.1} parent=1 // pred_fallthru
      _
    %v21 = vld [vmem:[%s0] sm:$0xff]
    %v22 = vld [vmem:[%s0 + $0x8] sm:$0xff]
    %v23 = vld [vmem:[%s0 + $0x10] sm:$0xff]
    %v24 = vld [vmem:[%s0 + $0x18] sm:$0xff]
    %v25 = vld [vmem:[%s0 + $0x20] sm:$0xff]
    %v26 = vld [vmem:[%s0 + $0x28] sm:$0xff]
    %v27 = vld [vmem:[%s0 + $0x30] sm:$0xff]
    %v28 = vld [vmem:[%s0 + $0x38] sm:$0xff]
    %v29 = vld [vmem:[%s0 + $0x40] sm:$0xff]
    %v30 = vld [vmem:[%s0 + $0x48] sm:$0xff]
    %v31 = vld [vmem:[%s0 + $0x50] sm:$0xff]
    %v32 = vld [vmem:[%s0 + $0x58] sm:$0xff]
    %v33 = vld [vmem:[%s0 + $0x60] sm:$0xff]
    %v34 = vld [vmem:[%s0 + $0x68] sm:$0xff]
    %v35 = vld [vmem:[%s0 + $0x70] sm:$0xff]
    %v36 = vld [vmem:[%s0 + $0x78] sm:$0xff]
    %v37 = vld [vmem:[%s0 + $0x80] sm:$0xff]
    %v38 = vld [vmem:[%s0 + $0x88] sm:$0xff]
    %v39 = vld [vmem:[%s0 + $0x90] sm:$0xff]
    %v40 = vld [vmem:[%s0 + $0x98] sm:$0xff]
    %v41 = vld [vmem:[%s0 + $0xa0] sm:$0xff]
    %v42 = vld [vmem:[%s0 + $0xa8] sm:$0xff]
    %v43 = vld [vmem:[%s0 + $0xb0] sm:$0xff]
    %v44 = vld [vmem:[%s0 + $0xb8] sm:$0xff]
    %v45 = vld [vmem:[%s0 + $0xc0] sm:$0xff]
    %v46 = vld [vmem:[%s0 + $0xc8] sm:$0xff]
    %v47 = vld [vmem:[%s0 + $0xd0] sm:$0xff]
    %v48 = vld [vmem:[%s0 + $0xd8] sm:$0xff]
    %v49 = vld [vmem:[%s0 + $0xe0] sm:$0xff]
    %v50 = vld [vmem:[%s0 + $0xe8] sm:$0xff]
    %v51 = vld [vmem:[%s0 + $0xf0] sm:$0xff]
    %v52 = vld [vmem:[%s0 + $0xf8] sm:$0xff]
    %v53 = vld [vmem:[%s1] sm:$0xff]
    %v54 = vld [vmem:[%s1 + $0x8] sm:$0xff]
    %v55 = vld [vmem:[%s1 + $0x10] sm:$0xff]
    %v56 = vld [vmem:[%s1 + $0x18] sm:$0xff]
    %v57 = vld [vmem:[%s1 + $0x20] sm:$0xff]
    %v58 = vld [vmem:[%s1 + $0x28] sm:$0xff]
    %v59 = vld [vmem:[%s1 + $0x30] sm:$0xff]
    %v60 = vld [vmem:[%s1 + $0x38] sm:$0xff]
    %v61 = vld [vmem:[%s2] sm:$0x1]
    %v63 = vlaneseq
    %v64 = vshrl.u32 %v63, 7
    %v65 = vsub.s32 0, %v64
    %v66 = vrot.slane %v61, %v65
    %vm68 = vcmask 523264
    %v70 = vsel %vm68, %v21, 0
    %v73 = vsel %vm68, %v22, 0
    %v76 = vsel %vm68, %v23, 0
    %v79 = vsel %vm68, %v24, 0
    %v82 = vsel %vm68, %v25, 0
    %v85 = vsel %vm68, %v26, 0
    %v88 = vsel %vm68, %v27, 0
    %v91 = vsel %vm68, %v28, 0
    %v94 = vsel %vm68, %v29, 0
    %v97 = vsel %vm68, %v30, 0
    %v100 = vsel %vm68, %v31, 0
    %v103 = vsel %vm68, %v32, 0
    %v106 = vsel %vm68, %v33, 0
    %v109 = vsel %vm68, %v34, 0
    %v112 = vsel %vm68, %v35, 0
    %v115 = vsel %vm68, %v36, 0
    %v118 = vsel %vm68, %v37, 0
    %v121 = vsel %vm68, %v38, 0
    %v124 = vsel %vm68, %v39, 0
    %v127 = vsel %vm68, %v40, 0
    %v130 = vsel %vm68, %v41, 0
    %v133 = vsel %vm68, %v42, 0
    %v136 = vsel %vm68, %v43, 0
    %v139 = vsel %vm68, %v44, 0
    %v142 = vsel %vm68, %v45, 0
    %v145 = vsel %vm68, %v46, 0
    %v148 = vsel %vm68, %v47, 0
    %v151 = vsel %vm68, %v48, 0
    %v154 = vsel %vm68, %v49, 0
    %v157 = vsel %vm68, %v50, 0
    %v160 = vsel %vm68, %v51, 0
    %v163 = vsel %vm68, %v52, 0
    %165 = vmatprep.subr.mxu0 0.0
    %166 = vmatpush1.msra.mxu0 %v53
    %167 = vmatprep.subr.mxu0 0.0
    %168 = vmatpush1.msra.mxu0 %v54
    %169 = vmatprep.subr.mxu0 0.0
    %170 = vmatpush1.msra.mxu0 %v55
    %171 = vmatprep.subr.mxu0 0.0
    %172 = vmatpush1.msra.mxu0 %v56
    %173 = vmatprep.subr.mxu0 0.0
    %174 = vmatpush1.msra.mxu0 %v57
    %175 = vmatprep.subr.mxu0 0.0
    %176 = vmatpush1.msra.mxu0 %v58
    %177 = vmatprep.subr.mxu0 0.0
    %178 = vmatpush1.msra.mxu0 %v59
    %179 = vmatprep.subr.mxu0 0.0
    %180 = vmatpush1.msra.mxu0 %v60
    %181 = vmatprep.subr.mxu0 0.0
    %182 = vmatpush1.msra.mxu0 0.0
    %183 = vmatprep.subr.mxu0 0.0
    %184 = vmatpush1.msra.mxu0 0.0
    %185 = vmatprep.subr.mxu0 0.0
    %186 = vmatpush1.msra.mxu0 0.0
    %187 = vmatprep.subr.mxu0 0.0
    %188 = vmatpush1.msra.mxu0 0.0
    %189 = vmatprep.subr.mxu0 0.0
    %190 = vmatpush1.msra.mxu0 0.0
    %191 = vmatprep.subr.mxu0 0.0
    %192 = vmatpush1.msra.mxu0 0.0
    %193 = vmatprep.subr.mxu0 0.0
    %194 = vmatpush1.msra.mxu0 0.0
    %195 = vmatprep.subr.mxu0 0.0
    %196 = vmatpush1.msra.mxu0 0.0
    %197 = vmatprep.subr.mxu0 0.0
    %198 = vmatpush1.msra.mxu0 0.0
    %199 = vmatprep.subr.mxu0 0.0
    %200 = vmatpush1.msra.mxu0 0.0
    %201 = vmatprep.subr.mxu0 0.0
    %202 = vmatpush1.msra.mxu0 0.0
    %203 = vmatprep.subr.mxu0 0.0
    %204 = vmatpush1.msra.mxu0 0.0
    %205 = vmatprep.subr.mxu0 0.0
    %206 = vmatpush1.msra.mxu0 0.0
    %207 = vmatprep.subr.mxu0 0.0
    %208 = vmatpush1.msra.mxu0 0.0
    %209 = vmatprep.subr.mxu0 0.0
    %210 = vmatpush1.msra.mxu0 0.0
    %211 = vmatprep.subr.mxu0 0.0
    %212 = vmatpush1.msra.mxu0 0.0
    %213 = vmatprep.subr.mxu0 0.0
    %214 = vmatpush1.msra.mxu0 0.0
    %215 = vmatprep.subr.mxu0 0.0
    %216 = vmatpush1.msra.mxu0 0.0
    %217 = vmatprep.subr.mxu0 0.0
    %218 = vmatpush1.msra.mxu0 0.0
    %219 = vmatprep.subr.mxu0 0.0
    %220 = vmatpush1.msra.mxu0 0.0
    %221 = vmatprep.subr.mxu0 0.0
    %222 = vmatpush1.msra.mxu0 0.0
    %223 = vmatprep.subr.mxu0 0.0
    %224 = vmatpush1.msra.mxu0 0.0
    %225 = vmatprep.subr.mxu0 0.0
    %226 = vmatpush1.msra.mxu0 0.0
    %227 = vmatprep.subr.mxu0 0.0
    %228 = vmatpush1.msra.mxu0 0.0
    %229 = vmatprep.mubr.f32.mxu0 0.0
    %230 = vmatmul.mubr.f32.gmra.mrb[0].mxu0 %v70
    %v231 = vpop.f32.mrb[0].mxu0
    %v232 = vadd.f32 %v66, %v231
    %v233 = vpop.f32.mrb[0].mxu0
    %234 = vmatprep.mubr.f32.mxu0 0.0
    %235 = vmatmul.mubr.f32.gmra.mrb[0].mxu0 %v73
    %v236 = vpop.f32.mrb[0].mxu0
    %v237 = vadd.f32 %v66, %v236
    %v238 = vpop.f32.mrb[0].mxu0
    %239 = vmatprep.mubr.f32.mxu0 0.0
    %240 = vmatmul.mubr.f32.gmra.mrb[0].mxu0 %v76
    %v241 = vpop.f32.mrb[0].mxu0
    %v242 = vadd.f32 %v66, %v241
    %v243 = vpop.f32.mrb[0].mxu0
    %244 = vmatprep.mubr.f32.mxu0 0.0
    %245 = vmatmul.mubr.f32.gmra.mrb[0].mxu0 %v79
    %v246 = vpop.f32.mrb[0].mxu0
    %v247 = vadd.f32 %v66, %v246
    %v248 = vpop.f32.mrb[0].mxu0
    %249 = vmatprep.mubr.f32.mxu0 0.0
    %250 = vmatmul.mubr.f32.gmra.mrb[0].mxu0 %v82
    %v251 = vpop.f32.mrb[0].mxu0
    %v252 = vadd.f32 %v66, %v251
    %v253 = vpop.f32.mrb[0].mxu0
    %254 = vmatprep.mubr.f32.mxu0 0.0
    %255 = vmatmul.mubr.f32.gmra.mrb[0].mxu0 %v85
    %v256 = vpop.f32.mrb[0].mxu0
    %v257 = vadd.f32 %v66, %v256
    %v258 = vpop.f32.mrb[0].mxu0
    %259 = vmatprep.mubr.f32.mxu0 0.0
    %260 = vmatmul.mubr.f32.gmra.mrb[0].mxu0 %v88
    %v261 = vpop.f32.mrb[0].mxu0
    %v262 = vadd.f32 %v66, %v261
    %v263 = vpop.f32.mrb[0].mxu0
    %264 = vmatprep.mubr.f32.mxu0 0.0
    %265 = vmatmul.mubr.f32.gmra.mrb[0].mxu0 %v91
    %v266 = vpop.f32.mrb[0].mxu0
    %v267 = vadd.f32 %v66, %v266
    %v268 = vpop.f32.mrb[0].mxu0
    %269 = vmatprep.mubr.f32.mxu0 0.0
    %270 = vmatmul.mubr.f32.gmra.mrb[0].mxu0 %v94
    %v271 = vpop.f32.mrb[0].mxu0
    %v272 = vadd.f32 %v66, %v271
    %v273 = vpop.f32.mrb[0].mxu0
    %274 = vmatprep.mubr.f32.mxu0 0.0
    %275 = vmatmul.mubr.f32.gmra.mrb[0].mxu0 %v97
    %v276 = vpop.f32.mrb[0].mxu0
    %v277 = vadd.f32 %v66, %v276
    %v278 = vpop.f32.mrb[0].mxu0
    %279 = vmatprep.mubr.f32.mxu0 0.0
    %280 = vmatmul.mubr.f32.gmra.mrb[0].mxu0 %v100
    %v281 = vpop.f32.mrb[0].mxu0
    %v282 = vadd.f32 %v66, %v281
    %v283 = vpop.f32.mrb[0].mxu0
    %284 = vmatprep.mubr.f32.mxu0 0.0
    %285 = vmatmul.mubr.f32.gmra.mrb[0].mxu0 %v103
    %v286 = vpop.f32.mrb[0].mxu0
    %v287 = vadd.f32 %v66, %v286
    %v288 = vpop.f32.mrb[0].mxu0
    %289 = vmatprep.mubr.f32.mxu0 0.0
    %290 = vmatmul.mubr.f32.gmra.mrb[0].mxu0 %v106
    %v291 = vpop.f32.mrb[0].mxu0
    %v292 = vadd.f32 %v66, %v291
    %v293 = vpop.f32.mrb[0].mxu0
    %294 = vmatprep.mubr.f32.mxu0 0.0
    %295 = vmatmul.mubr.f32.gmra.mrb[0].mxu0 %v109
    %v296 = vpop.f32.mrb[0].mxu0
    %v297 = vadd.f32 %v66, %v296
    %v298 = vpop.f32.mrb[0].mxu0
    %299 = vmatprep.mubr.f32.mxu0 0.0
    %300 = vmatmul.mubr.f32.gmra.mrb[0].mxu0 %v112
    %v301 = vpop.f32.mrb[0].mxu0
    %v302 = vadd.f32 %v66, %v301
    %v303 = vpop.f32.mrb[0].mxu0
    %304 = vmatprep.mubr.f32.mxu0 0.0
    %305 = vmatmul.mubr.f32.gmra.mrb[0].mxu0 %v115
    %v306 = vpop.f32.mrb[0].mxu0
    %v307 = vadd.f32 %v66, %v306
    %v308 = vpop.f32.mrb[0].mxu0
    %309 = vmatprep.mubr.f32.mxu0 0.0
    %310 = vmatmul.mubr.f32.gmra.mrb[0].mxu0 %v118
    %v311 = vpop.f32.mrb[0].mxu0
    %v312 = vadd.f32 %v66, %v311
    %v313 = vpop.f32.mrb[0].mxu0
    %314 = vmatprep.mubr.f32.mxu0 0.0
    %315 = vmatmul.mubr.f32.gmra.mrb[0].mxu0 %v121
    %v316 = vpop.f32.mrb[0].mxu0
    %v317 = vadd.f32 %v66, %v316
    %v318 = vpop.f32.mrb[0].mxu0
    %319 = vmatprep.mubr.f32.mxu0 0.0
    %320 = vmatmul.mubr.f32.gmra.mrb[0].mxu0 %v124
    %v321 = vpop.f32.mrb[0].mxu0
    %v322 = vadd.f32 %v66, %v321
    %v323 = vpop.f32.mrb[0].mxu0
    %324 = vmatprep.mubr.f32.mxu0 0.0
    %325 = vmatmul.mubr.f32.gmra.mrb[0].mxu0 %v127
    %v326 = vpop.f32.mrb[0].mxu0
    %v327 = vadd.f32 %v66, %v326
    %v328 = vpop.f32.mrb[0].mxu0
    %329 = vmatprep.mubr.f32.mxu0 0.0
    %330 = vmatmul.mubr.f32.gmra.mrb[0].mxu0 %v130
    %v331 = vpop.f32.mrb[0].mxu0
    %v332 = vadd.f32 %v66, %v331
    %v333 = vpop.f32.mrb[0].mxu0
    %334 = vmatprep.mubr.f32.mxu0 0.0
    %335 = vmatmul.mubr.f32.gmra.mrb[0].mxu0 %v133
    %v336 = vpop.f32.mrb[0].mxu0
    %v337 = vadd.f32 %v66, %v336
    %v338 = vpop.f32.mrb[0].mxu0
    %339 = vmatprep.mubr.f32.mxu0 0.0
    %340 = vmatmul.mubr.f32.gmra.mrb[0].mxu0 %v136
    %v341 = vpop.f32.mrb[0].mxu0
    %v342 = vadd.f32 %v66, %v341
    %v343 = vpop.f32.mrb[0].mxu0
    %344 = vmatprep.mubr.f32.mxu0 0.0
    %345 = vmatmul.mubr.f32.gmra.mrb[0].mxu0 %v139
    %v346 = vpop.f32.mrb[0].mxu0
    %v347 = vadd.f32 %v66, %v346
    %v348 = vpop.f32.mrb[0].mxu0
    %349 = vmatprep.mubr.f32.mxu0 0.0
    %350 = vmatmul.mubr.f32.gmra.mrb[0].mxu0 %v142
    %v351 = vpop.f32.mrb[0].mxu0
    %v352 = vadd.f32 %v66, %v351
    %v353 = vpop.f32.mrb[0].mxu0
    %354 = vmatprep.mubr.f32.mxu0 0.0
    %355 = vmatmul.mubr.f32.gmra.mrb[0].mxu0 %v145
    %v356 = vpop.f32.mrb[0].mxu0
    %v357 = vadd.f32 %v66, %v356
    %v358 = vpop.f32.mrb[0].mxu0
    %359 = vmatprep.mubr.f32.mxu0 0.0
    %360 = vmatmul.mubr.f32.gmra.mrb[0].mxu0 %v148
    %v361 = vpop.f32.mrb[0].mxu0
    %v362 = vadd.f32 %v66, %v361
    %v363 = vpop.f32.mrb[0].mxu0
    %364 = vmatprep.mubr.f32.mxu0 0.0
    %365 = vmatmul.mubr.f32.gmra.mrb[0].mxu0 %v151
    %v366 = vpop.f32.mrb[0].mxu0
    %v367 = vadd.f32 %v66, %v366
    %v368 = vpop.f32.mrb[0].mxu0
    %369 = vmatprep.mubr.f32.mxu0 0.0
    %370 = vmatmul.mubr.f32.gmra.mrb[0].mxu0 %v154
    %v371 = vpop.f32.mrb[0].mxu0
    %v372 = vadd.f32 %v66, %v371
    %v373 = vpop.f32.mrb[0].mxu0
    %374 = vmatprep.mubr.f32.mxu0 0.0
    %375 = vmatmul.mubr.f32.gmra.mrb[0].mxu0 %v157
    %v376 = vpop.f32.mrb[0].mxu0
    %v377 = vadd.f32 %v66, %v376
    %v378 = vpop.f32.mrb[0].mxu0
    %379 = vmatprep.mubr.f32.mxu0 0.0
    %380 = vmatmul.mubr.f32.gmra.mrb[0].mxu0 %v160
    %v381 = vpop.f32.mrb[0].mxu0
    %v382 = vadd.f32 %v66, %v381
    %v383 = vpop.f32.mrb[0].mxu0
    %384 = vmatprep.mubr.f32.mxu0 0.0
    %385 = vmatmul.mubr.f32.gmra.mrb[0].mxu0 %v163
    %v386 = vpop.f32.mrb[0].mxu0
    %v387 = vadd.f32 %v66, %v386
    %v388 = vpop.f32.mrb[0].mxu0
    %389 = vdwg.mxu0
    %v390 = vmax.f32 %v232, 0.0
    %v391 = vmax.f32 %v237, 0.0
    %v392 = vmax.f32 %v242, 0.0
    %v393 = vmax.f32 %v247, 0.0
    %v394 = vmax.f32 %v252, 0.0
    %v395 = vmax.f32 %v257, 0.0
    %v396 = vmax.f32 %v262, 0.0
    %v397 = vmax.f32 %v267, 0.0
    %v398 = vmax.f32 %v272, 0.0
    %v399 = vmax.f32 %v277, 0.0
    %v400 = vmax.f32 %v282, 0.0
    %v401 = vmax.f32 %v287, 0.0
    %v402 = vmax.f32 %v292, 0.0
    %v403 = vmax.f32 %v297, 0.0
    %v404 = vmax.f32 %v302, 0.0
    %v405 = vmax.f32 %v307, 0.0
    %v406 = vmax.f32 %v312, 0.0
    %v407 = vmax.f32 %v317, 0.0
    %v408 = vmax.f32 %v322, 0.0
    %v409 = vmax.f32 %v327, 0.0
    %v410 = vmax.f32 %v332, 0.0
    %v411 = vmax.f32 %v337, 0.0
    %v412 = vmax.f32 %v342, 0.0
    %v413 = vmax.f32 %v347, 0.0
    %v414 = vmax.f32 %v352, 0.0
    %v415 = vmax.f32 %v357, 0.0
    %v416 = vmax.f32 %v362, 0.0
    %v417 = vmax.f32 %v367, 0.0
    %v418 = vmax.f32 %v372, 0.0
    %v419 = vmax.f32 %v377, 0.0
    %v420 = vmax.f32 %v382, 0.0
    %v421 = vmax.f32 %v387, 0.0
    %v422 = vld [vmem:[%s3] sm:$0xff]
    %v423 = vld [vmem:[%s3 + $0x8] sm:$0xff]
    %v424 = vld [vmem:[%s3 + $0x10] sm:$0xff]
    %v425 = vld [vmem:[%s3 + $0x18] sm:$0xff]
    %v426 = vld [vmem:[%s3 + $0x20] sm:$0xff]
    %v427 = vld [vmem:[%s3 + $0x28] sm:$0xff]
    %v428 = vld [vmem:[%s3 + $0x30] sm:$0xff]
    %v429 = vld [vmem:[%s3 + $0x38] sm:$0xff]
    %v430 = vld [vmem:[%s3 + $0x40] sm:$0xff]
    %v431 = vld [vmem:[%s3 + $0x48] sm:$0xff]
    %v432 = vld [vmem:[%s3 + $0x50] sm:$0xff]
    %v433 = vld [vmem:[%s3 + $0x58] sm:$0xff]
    %v434 = vld [vmem:[%s3 + $0x60] sm:$0xff]
    %v435 = vld [vmem:[%s3 + $0x68] sm:$0xff]
    %v436 = vld [vmem:[%s3 + $0x70] sm:$0xff]
    %v437 = vld [vmem:[%s3 + $0x78] sm:$0xff]
    %v438 = vld [vmem:[%s4] sm:$0x1]
    %v440 = vlaneseq
    %v441 = vshrl.u32 %v440, 7
    %v442 = vsub.s32 0, %v441
    %v443 = vrot.slane %v438, %v442
    %445 = vmatprep.subr.mxu0 0.0
    %446 = vmatpush1.msra.mxu0 %v422
    %447 = vmatprep.subr.mxu0 0.0
    %448 = vmatpush1.msra.mxu0 %v423
    %449 = vmatprep.subr.mxu0 0.0
    %450 = vmatpush1.msra.mxu0 %v424
    %451 = vmatprep.subr.mxu0 0.0
    %452 = vmatpush1.msra.mxu0 %v425
    %453 = vmatprep.subr.mxu0 0.0
    %454 = vmatpush1.msra.mxu0 %v426
    %455 = vmatprep.subr.mxu0 0.0
    %456 = vmatpush1.msra.mxu0 %v427
    %457 = vmatprep.subr.mxu0 0.0
    %458 = vmatpush1.msra.mxu0 %v428
    %459 = vmatprep.subr.mxu0 0.0
    %460 = vmatpush1.msra.mxu0 %v429
    %461 = vmatprep.subr.mxu0 0.0
    %462 = vmatpush1.msra.mxu0 %v430
    %463 = vmatprep.subr.mxu0 0.0
    %464 = vmatpush1.msra.mxu0 %v431
    %465 = vmatprep.subr.mxu0 0.0
    %466 = vmatpush1.msra.mxu0 %v432
    %467 = vmatprep.subr.mxu0 0.0
    %468 = vmatpush1.msra.mxu0 %v433
    %469 = vmatprep.subr.mxu0 0.0
    %470 = vmatpush1.msra.mxu0 %v434
    %471 = vmatprep.subr.mxu0 0.0
    %472 = vmatpush1.msra.mxu0 %v435
    %473 = vmatprep.subr.mxu0 0.0
    %474 = vmatpush1.msra.mxu0 %v436
    %475 = vmatprep.subr.mxu0 0.0
    %476 = vmatpush1.msra.mxu0 %v437
    %477 = vmatprep.subr.mxu0 0.0
    %478 = vmatpush1.msra.mxu0 0.0
    %479 = vmatprep.subr.mxu0 0.0
    %480 = vmatpush1.msra.mxu0 0.0
    %481 = vmatprep.subr.mxu0 0.0
    %482 = vmatpush1.msra.mxu0 0.0
    %483 = vmatprep.subr.mxu0 0.0
    %484 = vmatpush1.msra.mxu0 0.0
    %485 = vmatprep.subr.mxu0 0.0
    %486 = vmatpush1.msra.mxu0 0.0
    %487 = vmatprep.subr.mxu0 0.0
    %488 = vmatpush1.msra.mxu0 0.0
    %489 = vmatprep.subr.mxu0 0.0
    %490 = vmatpush1.msra.mxu0 0.0
    %491 = vmatprep.subr.mxu0 0.0
    %492 = vmatpush1.msra.mxu0 0.0
    %493 = vmatprep.subr.mxu0 0.0
    %494 = vmatpush1.msra.mxu0 0.0
    %495 = vmatprep.subr.mxu0 0.0
    %496 = vmatpush1.msra.mxu0 0.0
    %497 = vmatprep.subr.mxu0 0.0
    %498 = vmatpush1.msra.mxu0 0.0
    %499 = vmatprep.subr.mxu0 0.0
    %500 = vmatpush1.msra.mxu0 0.0
    %501 = vmatprep.subr.mxu0 0.0
    %502 = vmatpush1.msra.mxu0 0.0
    %503 = vmatprep.subr.mxu0 0.0
    %504 = vmatpush1.msra.mxu0 0.0
    %505 = vmatprep.subr.mxu0 0.0
    %506 = vmatpush1.msra.mxu0 0.0
    %507 = vmatprep.subr.mxu0 0.0
    %508 = vmatpush1.msra.mxu0 0.0
    %509 = vmatprep.mubr.f32.mxu0 0.0
    %510 = vmatmul.mubr.f32.gmra.mrb[0].mxu0 %v390
    %v511 = vpop.f32.mrb[0].mxu0
    %v512 = vadd.f32 %v443, %v511
    %v513 = vpop.f32.mrb[0].mxu0
    %514 = vmatprep.mubr.f32.mxu0 0.0
    %515 = vmatmul.mubr.f32.gmra.mrb[0].mxu0 %v391
    %v516 = vpop.f32.mrb[0].mxu0
    %v517 = vadd.f32 %v443, %v516
    %v518 = vpop.f32.mrb[0].mxu0
    %519 = vmatprep.mubr.f32.mxu0 0.0
    %520 = vmatmul.mubr.f32.gmra.mrb[0].mxu0 %v392
    %v521 = vpop.f32.mrb[0].mxu0
    %v522 = vadd.f32 %v443, %v521
    %v523 = vpop.f32.mrb[0].mxu0
    %524 = vmatprep.mubr.f32.mxu0 0.0
    %525 = vmatmul.mubr.f32.gmra.mrb[0].mxu0 %v393
    %v526 = vpop.f32.mrb[0].mxu0
    %v527 = vadd.f32 %v443, %v526
    %v528 = vpop.f32.mrb[0].mxu0
    %529 = vmatprep.mubr.f32.mxu0 0.0
    %530 = vmatmul.mubr.f32.gmra.mrb[0].mxu0 %v394
    %v531 = vpop.f32.mrb[0].mxu0
    %v532 = vadd.f32 %v443, %v531
    %v533 = vpop.f32.mrb[0].mxu0
    %534 = vmatprep.mubr.f32.mxu0 0.0
    %535 = vmatmul.mubr.f32.gmra.mrb[0].mxu0 %v395
    %v536 = vpop.f32.mrb[0].mxu0
    %v537 = vadd.f32 %v443, %v536
    %v538 = vpop.f32.mrb[0].mxu0
    %539 = vmatprep.mubr.f32.mxu0 0.0
    %540 = vmatmul.mubr.f32.gmra.mrb[0].mxu0 %v396
    %v541 = vpop.f32.mrb[0].mxu0
    %v542 = vadd.f32 %v443, %v541
    %v543 = vpop.f32.mrb[0].mxu0
    %544 = vmatprep.mubr.f32.mxu0 0.0
    %545 = vmatmul.mubr.f32.gmra.mrb[0].mxu0 %v397
    %v546 = vpop.f32.mrb[0].mxu0
    %v547 = vadd.f32 %v443, %v546
    %v548 = vpop.f32.mrb[0].mxu0
    %549 = vmatprep.mubr.f32.mxu0 0.0
    %550 = vmatmul.mubr.f32.gmra.mrb[0].mxu0 %v398
    %v551 = vpop.f32.mrb[0].mxu0
    %v552 = vadd.f32 %v443, %v551
    %v553 = vpop.f32.mrb[0].mxu0
    %554 = vmatprep.mubr.f32.mxu0 0.0
    %555 = vmatmul.mubr.f32.gmra.mrb[0].mxu0 %v399
    %v556 = vpop.f32.mrb[0].mxu0
    %v557 = vadd.f32 %v443, %v556
    %v558 = vpop.f32.mrb[0].mxu0
    %559 = vmatprep.mubr.f32.mxu0 0.0
    %560 = vmatmul.mubr.f32.gmra.mrb[0].mxu0 %v400
    %v561 = vpop.f32.mrb[0].mxu0
    %v562 = vadd.f32 %v443, %v561
    %v563 = vpop.f32.mrb[0].mxu0
    %564 = vmatprep.mubr.f32.mxu0 0.0
    %565 = vmatmul.mubr.f32.gmra.mrb[0].mxu0 %v401
    %v566 = vpop.f32.mrb[0].mxu0
    %v567 = vadd.f32 %v443, %v566
    %v568 = vpop.f32.mrb[0].mxu0
    %569 = vmatprep.mubr.f32.mxu0 0.0
    %570 = vmatmul.mubr.f32.gmra.mrb[0].mxu0 %v402
    %v571 = vpop.f32.mrb[0].mxu0
    %v572 = vadd.f32 %v443, %v571
    %v573 = vpop.f32.mrb[0].mxu0
    %574 = vmatprep.mubr.f32.mxu0 0.0
    %575 = vmatmul.mubr.f32.gmra.mrb[0].mxu0 %v403
    %v576 = vpop.f32.mrb[0].mxu0
    %v577 = vadd.f32 %v443, %v576
    %v578 = vpop.f32.mrb[0].mxu0
    %579 = vmatprep.mubr.f32.mxu0 0.0
    %580 = vmatmul.mubr.f32.gmra.mrb[0].mxu0 %v404
    %v581 = vpop.f32.mrb[0].mxu0
    %v582 = vadd.f32 %v443, %v581
    %v583 = vpop.f32.mrb[0].mxu0
    %584 = vmatprep.mubr.f32.mxu0 0.0
    %585 = vmatmul.mubr.f32.gmra.mrb[0].mxu0 %v405
    %v586 = vpop.f32.mrb[0].mxu0
    %v587 = vadd.f32 %v443, %v586
    %v588 = vpop.f32.mrb[0].mxu0
    %589 = vmatprep.mubr.f32.mxu0 0.0
    %590 = vmatmul.mubr.f32.gmra.mrb[0].mxu0 %v406
    %v591 = vpop.f32.mrb[0].mxu0
    %v592 = vadd.f32 %v443, %v591
    %v593 = vpop.f32.mrb[0].mxu0
    %594 = vmatprep.mubr.f32.mxu0 0.0
    %595 = vmatmul.mubr.f32.gmra.mrb[0].mxu0 %v407
    %v596 = vpop.f32.mrb[0].mxu0
    %v597 = vadd.f32 %v443, %v596
    %v598 = vpop.f32.mrb[0].mxu0
    %599 = vmatprep.mubr.f32.mxu0 0.0
    %600 = vmatmul.mubr.f32.gmra.mrb[0].mxu0 %v408
    %v601 = vpop.f32.mrb[0].mxu0
    %v602 = vadd.f32 %v443, %v601
    %v603 = vpop.f32.mrb[0].mxu0
    %604 = vmatprep.mubr.f32.mxu0 0.0
    %605 = vmatmul.mubr.f32.gmra.mrb[0].mxu0 %v409
    %v606 = vpop.f32.mrb[0].mxu0
    %v607 = vadd.f32 %v443, %v606
    %v608 = vpop.f32.mrb[0].mxu0
    %609 = vmatprep.mubr.f32.mxu0 0.0
    %610 = vmatmul.mubr.f32.gmra.mrb[0].mxu0 %v410
    %v611 = vpop.f32.mrb[0].mxu0
    %v612 = vadd.f32 %v443, %v611
    %v613 = vpop.f32.mrb[0].mxu0
    %614 = vmatprep.mubr.f32.mxu0 0.0
    %615 = vmatmul.mubr.f32.gmra.mrb[0].mxu0 %v411
    %v616 = vpop.f32.mrb[0].mxu0
    %v617 = vadd.f32 %v443, %v616
    %v618 = vpop.f32.mrb[0].mxu0
    %619 = vmatprep.mubr.f32.mxu0 0.0
    %620 = vmatmul.mubr.f32.gmra.mrb[0].mxu0 %v412
    %v621 = vpop.f32.mrb[0].mxu0
    %v622 = vadd.f32 %v443, %v621
    %v623 = vpop.f32.mrb[0].mxu0
    %624 = vmatprep.mubr.f32.mxu0 0.0
    %625 = vmatmul.mubr.f32.gmra.mrb[0].mxu0 %v413
    %v626 = vpop.f32.mrb[0].mxu0
    %v627 = vadd.f32 %v443, %v626
    %v628 = vpop.f32.mrb[0].mxu0
    %629 = vmatprep.mubr.f32.mxu0 0.0
    %630 = vmatmul.mubr.f32.gmra.mrb[0].mxu0 %v414
    %v631 = vpop.f32.mrb[0].mxu0
    %v632 = vadd.f32 %v443, %v631
    %v633 = vpop.f32.mrb[0].mxu0
    %634 = vmatprep.mubr.f32.mxu0 0.0
    %635 = vmatmul.mubr.f32.gmra.mrb[0].mxu0 %v415
    %v636 = vpop.f32.mrb[0].mxu0
    %v637 = vadd.f32 %v443, %v636
    %v638 = vpop.f32.mrb[0].mxu0
    %639 = vmatprep.mubr.f32.mxu0 0.0
    %640 = vmatmul.mubr.f32.gmra.mrb[0].mxu0 %v416
    %v641 = vpop.f32.mrb[0].mxu0
    %v642 = vadd.f32 %v443, %v641
    %v643 = vpop.f32.mrb[0].mxu0
    %644 = vmatprep.mubr.f32.mxu0 0.0
    %645 = vmatmul.mubr.f32.gmra.mrb[0].mxu0 %v417
    %v646 = vpop.f32.mrb[0].mxu0
    %v647 = vadd.f32 %v443, %v646
    %v648 = vpop.f32.mrb[0].mxu0
    %649 = vmatprep.mubr.f32.mxu0 0.0
    %650 = vmatmul.mubr.f32.gmra.mrb[0].mxu0 %v418
    %v651 = vpop.f32.mrb[0].mxu0
    %v652 = vadd.f32 %v443, %v651
    %v653 = vpop.f32.mrb[0].mxu0
    %654 = vmatprep.mubr.f32.mxu0 0.0
    %655 = vmatmul.mubr.f32.gmra.mrb[0].mxu0 %v419
    %v656 = vpop.f32.mrb[0].mxu0
    %v657 = vadd.f32 %v443, %v656
    %v658 = vpop.f32.mrb[0].mxu0
    %659 = vmatprep.mubr.f32.mxu0 0.0
    %660 = vmatmul.mubr.f32.gmra.mrb[0].mxu0 %v420
    %v661 = vpop.f32.mrb[0].mxu0
    %v662 = vadd.f32 %v443, %v661
    %v663 = vpop.f32.mrb[0].mxu0
    %664 = vmatprep.mubr.f32.mxu0 0.0
    %665 = vmatmul.mubr.f32.gmra.mrb[0].mxu0 %v421
    %v666 = vpop.f32.mrb[0].mxu0
    %v667 = vadd.f32 %v443, %v666
    %v668 = vpop.f32.mrb[0].mxu0
    %669 = vdwg.mxu0
    %670 = vst [vmem:[#allocation2] sm:$0xff] %v512
    %671 = vst [vmem:[#allocation2 + $0x8] sm:$0xff] %v517
    %672 = vst [vmem:[#allocation2 + $0x10] sm:$0xff] %v522
    %673 = vst [vmem:[#allocation2 + $0x18] sm:$0xff] %v527
    %674 = vst [vmem:[#allocation2 + $0x20] sm:$0xff] %v532
    %675 = vst [vmem:[#allocation2 + $0x28] sm:$0xff] %v537
    %676 = vst [vmem:[#allocation2 + $0x30] sm:$0xff] %v542
    %677 = vst [vmem:[#allocation2 + $0x38] sm:$0xff] %v547
    %678 = vst [vmem:[#allocation2 + $0x40] sm:$0xff] %v552
    %679 = vst [vmem:[#allocation2 + $0x48] sm:$0xff] %v557
    %680 = vst [vmem:[#allocation2 + $0x50] sm:$0xff] %v562
    %681 = vst [vmem:[#allocation2 + $0x58] sm:$0xff] %v567
    %682 = vst [vmem:[#allocation2 + $0x60] sm:$0xff] %v572
    %683 = vst [vmem:[#allocation2 + $0x68] sm:$0xff] %v577
    %684 = vst [vmem:[#allocation2 + $0x70] sm:$0xff] %v582
    %685 = vst [vmem:[#allocation2 + $0x78] sm:$0xff] %v587
    %686 = vst [vmem:[#allocation2 + $0x80] sm:$0xff] %v592
    %687 = vst [vmem:[#allocation2 + $0x88] sm:$0xff] %v597
    %688 = vst [vmem:[#allocation2 + $0x90] sm:$0xff] %v602
    %689 = vst [vmem:[#allocation2 + $0x98] sm:$0xff] %v607
    %690 = vst [vmem:[#allocation2 + $0xa0] sm:$0xff] %v612
    %691 = vst [vmem:[#allocation2 + $0xa8] sm:$0xff] %v617
    %692 = vst [vmem:[#allocation2 + $0xb0] sm:$0xff] %v622
    %693 = vst [vmem:[#allocation2 + $0xb8] sm:$0xff] %v627
    %694 = vst [vmem:[#allocation2 + $0xc0] sm:$0xff] %v632
    %695 = vst [vmem:[#allocation2 + $0xc8] sm:$0xff] %v637
    %696 = vst [vmem:[#allocation2 + $0xd0] sm:$0xff] %v642
    %697 = vst [vmem:[#allocation2 + $0xd8] sm:$0xff] %v647
    %698 = vst [vmem:[#allocation2 + $0xe0] sm:$0xff] %v652
    %699 = vst [vmem:[#allocation2 + $0xe8] sm:$0xff] %v657
    %700 = vst [vmem:[#allocation2 + $0xf0] sm:$0xff] %v662
    %701 = vst [vmem:[#allocation2 + $0xf8] sm:$0xff] %v667
    // Predicated region
    $region22: #{tpu_custom_call.1} parent=1 // pred_check
      _
    $region23: #{tpu_custom_call.1} parent=1 // pred_check_branch
      %703 = sbr.rel (0) target = $region25
    $region24: #{tpu_custom_call.1} parent=1 // pred_region
      %s705 = ssub.s32 4096, 4096
      %706 = vsyncadd [#allocation3], %s705
      %s707 = sshll.u32 [#allocation2], 4
      %s708 = int_to_ptr.vmem [resolvable:$true] %s707
      %713 = dma.vmem_to_hbm [thread:$0]  %s708, 4096, %s5, [#allocation3], 128, 128, 8
    $region25: #{tpu_custom_call.1} parent=1 // pred_fallthru
      _
    // Predicated region
    $region26: #{tpu_custom_call.1} parent=1 // pred_check
      _
    $region27: #{tpu_custom_call.1} parent=1 // pred_check_branch
      %715 = sbr.rel (0) target = $region29
    $region28: #{tpu_custom_call.1} parent=1 // pred_region
      %716 = dma.done [#allocation3], 4096
    $region29: #{tpu_custom_call.1} parent=1 // pred_fallthru
      _
    %717 = vsyncpa [#allocation3], 1

</llo_original>
